<compile_context>
chip_gen: v6e
topology: v6e:2x2x1
jax: 0.10.0
libtpu: 0.0.40
codegen_flags: <defaults>
</compile_context>

<pallas_src>
import jax
import jax.numpy as jnp
from jax.experimental import pallas as pl
from jax.experimental.pallas import tpu as pltpu

LANE = 128       # lane width: class dim is zero-padded up to a multiple of this
MAX_TB = 2048    # max batch-tile rows per grid step


def _round_up(x, m):
    return (x + m - 1) // m * m


def _sublane_multiple(dtype):
    # Minimum sublane packing for the second-to-last dim, by element width.
    itemsize = jnp.dtype(dtype).itemsize
    if itemsize >= 4:
        return 8
    if itemsize == 2:
        return 16
    return 32


def head_kernel(x_ref, w_ref, b_ref, o_ref):
    # x_ref: (TB, F) tile, w_ref: (F, C_pad) resident, b_ref: (1, C_pad),
    # o_ref: (TB, C_pad). Single MXU matmul, f32 accumulation, bias add.
    acc = jnp.dot(x_ref[...], w_ref[...], preferred_element_type=jnp.float32)
    o_ref[...] = (acc + b_ref[...].astype(jnp.float32)).astype(o_ref.dtype)


def prepare_head_params(w, b):
    """One-time parameter prep (hoisted out of the per-call path).

    w: [n_clss, feat_dim]  (PyTorch nn.Linear weight layout)
    b: [n_clss]
    returns (w_t_padded [feat_dim, C_pad], b_padded [1, C_pad], n_clss)
    """
    C, F = w.shape
    C_pad = _round_up(C, LANE)
    w_t = jnp.pad(jnp.transpose(w), ((0, 0), (0, C_pad - C)))     # [F, C_pad]
    b2 = jnp.pad(b, (0, C_pad - C)).reshape(1, C_pad)             # [1, C_pad]
    return w_t, b2, C


def head_forward(x, w_t, b2, n_clss):
    """Forward of Head with pre-prepared (transposed, lane-padded) params.

    x:   [B, feat_dim]
    w_t: [feat_dim, C_pad]
    b2:  [1, C_pad]
    returns: [B, n_clss] in x.dtype
    """
    B, F = x.shape
    Fw, C_pad = w_t.shape
    assert F == Fw, "feature dim mismatch"

    # --- batch tiling (no wrapper-side padding of x) -------------------------
    sub = _sublane_multiple(x.dtype)
    # >= 2 grid steps for large B (lets v7x shard across both TensorCores),
    # capped at MAX_TB; never below one sublane group.
    TB = max(sub, min(MAX_TB, _round_up(pl.cdiv(B, 2), sub)))
    num_tiles = pl.cdiv(B, TB)   # ragged last block handled/masked by Pallas

    x_item = jnp.dtype(x.dtype).itemsize
    cost = pl.CostEstimate(
        flops=2 * B * F * C_pad,
        transcendentals=0,
        bytes_accessed=(B * F * x_item                              # x
                        + F * C_pad * jnp.dtype(w_t.dtype).itemsize  # weight
                        + C_pad * jnp.dtype(b2.dtype).itemsize       # bias
                        + B * C_pad * x_item),                       # output
    )

    out_padded = pl.pallas_call(
        head_kernel,
        out_shape=jax.ShapeDtypeStruct((B, C_pad), x.dtype),
        grid=(num_tiles,),
        in_specs=[
            pl.BlockSpec((TB, F), lambda i: (i, 0),
                         memory_space=pltpu.MemorySpace.VMEM),
            pl.BlockSpec((F, C_pad), lambda i: (0, 0),      # resident weight
                         memory_space=pltpu.MemorySpace.VMEM),
            pl.BlockSpec((1, C_pad), lambda i: (0, 0),       # resident bias
                         memory_space=pltpu.MemorySpace.VMEM),
        ],
        out_specs=pl.BlockSpec((TB, C_pad), lambda i: (i, 0),
                               memory_space=pltpu.MemorySpace.VMEM),
        compiler_params=pltpu.CompilerParams(
            dimension_semantics=("parallel",)),
        cost_estimate=cost,
    )(x, w_t, b2)

    # Drop the zero-padded class lanes (exact zeros + bias of padded classes).
    return out_padded[:, :n_clss]


if __name__ == "__main__":
    feat_dim = 256   # Head.feat_dim
    n_clss = 10
    batch = 8

    key = jax.random.PRNGKey(0)
    kx, kw, kb = jax.random.split(key, 3)

    # Deterministic init mimicking nn.Linear's uniform(-1/sqrt(F), 1/sqrt(F)).
    bound = 1.0 / (feat_dim ** 0.5)
    w = jax.random.uniform(kw, (n_clss, feat_dim), jnp.float32, -bound, bound)
    b = jax.random.uniform(kb, (n_clss,), jnp.float32, -bound, bound)
    x = jax.random.normal(kx, (batch, feat_dim), jnp.float32)

    # Parameter prep once (would live at module-init time), forward per-call.
    w_t, b2, C = prepare_head_params(w, b)
    out = head_forward(x, w_t, b2, C)
    out = jax.block_until_ready(out)

    # Reference check against plain JAX (same math as torch F.linear).
    ref = x @ w.T + b
    assert out.shape == (batch, n_clss)
    assert jnp.allclose(out, ref, atol=1e-5, rtol=1e-5)

    print("KERNEL_OK")
</pallas_src>

<mosaic_0001>
module attributes {stable_mosaic.version = 11 : i64} {
  func.func @head_kernel(%arg0: i32, %arg1: memref<8x256xf32, #tpu.memory_space<vmem>>, %arg2: memref<256x128xf32, #tpu.memory_space<vmem>>, %arg3: memref<1x128xf32, #tpu.memory_space<vmem>>, %arg4: memref<8x128xf32, #tpu.memory_space<vmem>>) attributes {dimension_semantics = [#tpu.dimension_semantics<parallel>], iteration_bounds = array<i64: 1>, scalar_prefetch = 0 : i64, scratch_operands = 0 : i64, tpu.core_type = #tpu.core_type<tc>, window_params = [{transform_indices = @transform_0, window_bounds = array<i64: 8, 256>}, {pipeline_mode = #tpu.pipeline_mode<synchronous>, transform_indices = @transform_1, window_bounds = array<i64: 256, 128>}, {pipeline_mode = #tpu.pipeline_mode<synchronous>, transform_indices = @transform_2, window_bounds = array<i64: 1, 128>}, {transform_indices = @transform_3, window_bounds = array<i64: 8, 128>}]} {
    %c0 = arith.constant 0 : index
    %c0_0 = arith.constant 0 : index
    %0 = vector.load %arg1[%c0, %c0_0] : memref<8x256xf32, #tpu.memory_space<vmem>>, vector<8x256xf32>
    %c0_1 = arith.constant 0 : index
    %c0_2 = arith.constant 0 : index
    %1 = vector.load %arg2[%c0_1, %c0_2] : memref<256x128xf32, #tpu.memory_space<vmem>>, vector<256x128xf32>
    %cst = arith.constant dense<0.000000e+00> : vector<8x128xf32>
    %2 = tpu.matmul %0, %1, %cst {dimension_numbers = #tpu.dot_dimension_numbers<[1], [0], [0], [1], [0, 0, 1, 1], [], []>} : vector<8x256xf32>, vector<256x128xf32>, vector<8x128xf32> -> vector<8x128xf32>
    %c0_3 = arith.constant 0 : index
    %c0_4 = arith.constant 0 : index
    %3 = vector.load %arg3[%c0_3, %c0_4] : memref<1x128xf32, #tpu.memory_space<vmem>>, vector<1x128xf32>
    %4 = vector.broadcast %3 : vector<1x128xf32> to vector<8x128xf32>
    %5 = arith.addf %2, %4 : vector<8x128xf32>
    %c0_5 = arith.constant 0 : index
    %c0_6 = arith.constant 0 : index
    %6 = vector.load %arg4[%c0_5, %c0_6] : memref<8x128xf32, #tpu.memory_space<vmem>>, vector<8x128xf32>
    tpu.vector_store %arg4[%c0_5, %c0_6], %5 {strides = array<i32>} : memref<8x128xf32, #tpu.memory_space<vmem>>, vector<8x128xf32>,
    return
  }
  func.func @transform_0(%arg0: i32) -> (i32, i32) {
    %c0_i32 = arith.constant 0 : i32
    %c0_i32_0 = arith.constant 0 : i32
    return %arg0, %c0_i32 : i32, i32
  }
  func.func @transform_1(%arg0: i32) -> (i32, i32) {
    %c0_i32 = arith.constant 0 : i32
    %c0_i32_0 = arith.constant 0 : i32
    %c0_i32_1 = arith.constant 0 : i32
    return %c0_i32, %c0_i32_0 : i32, i32
  }
  func.func @transform_2(%arg0: i32) -> (i32, i32) {
    %c0_i32 = arith.constant 0 : i32
    %c0_i32_0 = arith.constant 0 : i32
    %c0_i32_1 = arith.constant 0 : i32
    return %c0_i32, %c0_i32_0 : i32, i32
  }
  func.func @transform_3(%arg0: i32) -> (i32, i32) {
    %c0_i32 = arith.constant 0 : i32
    %c0_i32_0 = arith.constant 0 : i32
    return %arg0, %c0_i32 : i32, i32
  }
}

</mosaic_0001>

<llo_original>
// kernel: tpu_custom_call.1
$region0: #{tpu_custom_call.1}
  #allocation0 [shape = 'u32[]', space=smem, size = 0x4, offset = 0x4, fixed_abs, tag = 'smem constant byte address 0x4 - core index']
  #allocation1 [shape = 'u32[144,128]{1,0:T(1,128)}', space=vmem, size = 0x12000, scoped, tag = 'internal scratch']
  %s0 = inlined_call_operand.hbm [shape: f32[8,256], index: 0, kind: input, shape index: {}]
  %s1 = inlined_call_operand.hbm [shape: f32[256,128], index: 1, kind: input, shape index: {}]
  %s2 = inlined_call_operand.vmem [shape: f32[1,128], index: 2, kind: input, shape index: {}]
  %s3 = inlined_call_operand.hbm [shape: f32[8,128], index: 3, kind: output, shape index: {}]
  %s4 = sld [smem:[#allocation0]]
  $region30: #{tpu_custom_call.1} parent=0
    _
  %s6 = ssub.s32 1, %s4
  %s7 = scalar_select 0, %s6, %s4
  $region1: #{tpu_custom_call.1} parent=0
    #allocation2 [shape = 'u8[8192]{0}', space=vmem, size = 0x2000, scoped, tag = 'input window, operand 0, single buffered']
    #allocation3 [shape = 's32[1]{0}', space=sflag, size = 0x4, scoped, tag = 'scoped memory for tpu_custom_call.1']
    #allocation4 [shape = 's32[1]{0}', space=sflag, size = 0x4, scoped, tag = 'scoped memory for tpu_custom_call.1']
    #allocation5 [shape = 'u8[131072]{0}', space=vmem, size = 0x20000, scoped, tag = 'input window, operand 1, single buffered']
    #allocation6 [shape = 's32[1]{0}', space=sflag, size = 0x4, scoped, tag = 'scoped memory for tpu_custom_call.1']
    #allocation7 [shape = 'u8[4096]{0}', space=vmem, size = 0x1000, scoped, tag = 'output window, operand 0, single buffered']
    %8 = vsyncpa [#allocation3], 0
    %9 = vsyncpa [#allocation6], 0
    %10 = vsyncpa [#allocation4], 0
    // Predicated region
    $region2: #{tpu_custom_call.1} parent=1 // pred_check
      _
    $region3: #{tpu_custom_call.1} parent=1 // pred_check_branch
      %12 = sbr.rel (0) target = $region5
    $region4: #{tpu_custom_call.1} parent=1 // pred_region
      %s14 = ssub.s32 256, 256
      %15 = vsyncadd [#allocation3], %s14
      %s17 = sshll.u32 [#allocation2], 4
      %s18 = int_to_ptr.vmem [resolvable:$true] %s17
      %20 = dma.hbm_to_vmem [thread:$0]  %s0, 256, %s18, [#allocation3]
    $region5: #{tpu_custom_call.1} parent=1 // pred_fallthru
      _
    // Predicated region
    $region6: #{tpu_custom_call.1} parent=1 // pred_check
      _
    $region7: #{tpu_custom_call.1} parent=1 // pred_check_branch
      %22 = sbr.rel (0) target = $region9
    $region8: #{tpu_custom_call.1} parent=1 // pred_region
      %s24 = ssub.s32 4096, 4096
      %25 = vsyncadd [#allocation6], %s24
      %s26 = sshll.u32 [#allocation5], 4
      %s27 = int_to_ptr.vmem [resolvable:$true] %s26
      %32 = dma.hbm_to_vmem [thread:$0]  %s1, 4096, %s27, [#allocation6], 128, 128, 8
    $region9: #{tpu_custom_call.1} parent=1 // pred_fallthru
      _
    // Predicated region
    $region10: #{tpu_custom_call.1} parent=1 // pred_check
      _
    $region11: #{tpu_custom_call.1} parent=1 // pred_check_branch
      %34 = sbr.rel (0) target = $region13
    $region12: #{tpu_custom_call.1} parent=1 // pred_region
      _
    $region13: #{tpu_custom_call.1} parent=1 // pred_fallthru
      _
    // Predicated region
    $region14: #{tpu_custom_call.1} parent=1 // pred_check
      _
    $region15: #{tpu_custom_call.1} parent=1 // pred_check_branch
      %36 = sbr.rel (0) target = $region17
    $region16: #{tpu_custom_call.1} parent=1 // pred_region
      %37 = dma.done [#allocation3], 256
    $region17: #{tpu_custom_call.1} parent=1 // pred_fallthru
      _
    // Predicated region
    $region18: #{tpu_custom_call.1} parent=1 // pred_check
      _
    $region19: #{tpu_custom_call.1} parent=1 // pred_check_branch
      %39 = sbr.rel (0) target = $region21
    $region20: #{tpu_custom_call.1} parent=1 // pred_region
      %40 = dma.done [#allocation6], 4096
    $region21: #{tpu_custom_call.1} parent=1 // pred_fallthru
      _
    %v41 = vld [vmem:[#allocation2] sm:$0xff]
    %v42 = vld [vmem:[#allocation2 + $0x8] sm:$0xff]
    %v43 = vld [vmem:[#allocation5] sm:$0xff]
    %v44 = vld [vmem:[#allocation5 + $0x8] sm:$0xff]
    %v45 = vld [vmem:[#allocation5 + $0x10] sm:$0xff]
    %v46 = vld [vmem:[#allocation5 + $0x18] sm:$0xff]
    %v47 = vld [vmem:[#allocation5 + $0x20] sm:$0xff]
    %v48 = vld [vmem:[#allocation5 + $0x28] sm:$0xff]
    %v49 = vld [vmem:[#allocation5 + $0x30] sm:$0xff]
    %v50 = vld [vmem:[#allocation5 + $0x38] sm:$0xff]
    %v51 = vld [vmem:[#allocation5 + $0x40] sm:$0xff]
    %v52 = vld [vmem:[#allocation5 + $0x48] sm:$0xff]
    %v53 = vld [vmem:[#allocation5 + $0x50] sm:$0xff]
    %v54 = vld [vmem:[#allocation5 + $0x58] sm:$0xff]
    %v55 = vld [vmem:[#allocation5 + $0x60] sm:$0xff]
    %v56 = vld [vmem:[#allocation5 + $0x68] sm:$0xff]
    %v57 = vld [vmem:[#allocation5 + $0x70] sm:$0xff]
    %v58 = vld [vmem:[#allocation5 + $0x78] sm:$0xff]
    %v59 = vld [vmem:[#allocation5 + $0x80] sm:$0xff]
    %v60 = vld [vmem:[#allocation5 + $0x88] sm:$0xff]
    %v61 = vld [vmem:[#allocation5 + $0x90] sm:$0xff]
    %v62 = vld [vmem:[#allocation5 + $0x98] sm:$0xff]
    %v63 = vld [vmem:[#allocation5 + $0xa0] sm:$0xff]
    %v64 = vld [vmem:[#allocation5 + $0xa8] sm:$0xff]
    %v65 = vld [vmem:[#allocation5 + $0xb0] sm:$0xff]
    %v66 = vld [vmem:[#allocation5 + $0xb8] sm:$0xff]
    %v67 = vld [vmem:[#allocation5 + $0xc0] sm:$0xff]
    %v68 = vld [vmem:[#allocation5 + $0xc8] sm:$0xff]
    %v69 = vld [vmem:[#allocation5 + $0xd0] sm:$0xff]
    %v70 = vld [vmem:[#allocation5 + $0xd8] sm:$0xff]
    %v71 = vld [vmem:[#allocation5 + $0xe0] sm:$0xff]
    %v72 = vld [vmem:[#allocation5 + $0xe8] sm:$0xff]
    %v73 = vld [vmem:[#allocation5 + $0xf0] sm:$0xff]
    %v74 = vld [vmem:[#allocation5 + $0xf8] sm:$0xff]
    %v75 = vld [vmem:[%s2] sm:$0x1]
    %v77 = vlaneseq
    %v78 = vshrl.u32 %v77, 7
    %v79 = vsub.s32 0, %v78
    %v80 = vrot.slane %v75, %v79
    %82 = vmatprep.subr.mxu0 0.0
    %83 = vmatpush1.msra.mxu0 %v58
    %84 = vmatprep.subr.mxu0 0.0
    %85 = vmatpush1.msra.mxu0 %v57
    %86 = vmatprep.subr.mxu0 0.0
    %87 = vmatpush1.msra.mxu0 %v56
    %88 = vmatprep.subr.mxu0 0.0
    %89 = vmatpush1.msra.mxu0 %v55
    %90 = vmatprep.subr.mxu0 0.0
    %91 = vmatpush1.msra.mxu0 %v54
    %92 = vmatprep.subr.mxu0 0.0
    %93 = vmatpush1.msra.mxu0 %v53
    %94 = vmatprep.subr.mxu0 0.0
    %95 = vmatpush1.msra.mxu0 %v52
    %96 = vmatprep.subr.mxu0 0.0
    %97 = vmatpush1.msra.mxu0 %v51
    %98 = vmatprep.subr.mxu0 0.0
    %99 = vmatpush1.msra.mxu0 %v50
    %100 = vmatprep.subr.mxu0 0.0
    %101 = vmatpush1.msra.mxu0 %v49
    %102 = vmatprep.subr.mxu0 0.0
    %103 = vmatpush1.msra.mxu0 %v48
    %104 = vmatprep.subr.mxu0 0.0
    %105 = vmatpush1.msra.mxu0 %v47
    %106 = vmatprep.subr.mxu0 0.0
    %107 = vmatpush1.msra.mxu0 %v46
    %108 = vmatprep.subr.mxu0 0.0
    %109 = vmatpush1.msra.mxu0 %v45
    %110 = vmatprep.subr.mxu0 0.0
    %111 = vmatpush1.msra.mxu0 %v44
    %112 = vmatprep.subr.mxu0 0.0
    %113 = vmatpush1.msra.mxu0 %v43
    %114 = vmatprep.subr.mxu0 0.0
    %115 = vmatpush2.msra.mxu0 %v74
    %116 = vmatprep.subr.mxu0 0.0
    %117 = vmatpush2.msra.mxu0 %v73
    %118 = vmatprep.subr.mxu0 0.0
    %119 = vmatpush2.msra.mxu0 %v72
    %120 = vmatprep.subr.mxu0 0.0
    %121 = vmatpush2.msra.mxu0 %v71
    %122 = vmatprep.subr.mxu0 0.0
    %123 = vmatpush2.msra.mxu0 %v70
    %124 = vmatprep.subr.mxu0 0.0
    %125 = vmatpush2.msra.mxu0 %v69
    %126 = vmatprep.subr.mxu0 0.0
    %127 = vmatpush2.msra.mxu0 %v68
    %128 = vmatprep.subr.mxu0 0.0
    %129 = vmatpush2.msra.mxu0 %v67
    %130 = vmatprep.subr.mxu0 0.0
    %131 = vmatpush2.msra.mxu0 %v66
    %132 = vmatprep.subr.mxu0 0.0
    %133 = vmatpush2.msra.mxu0 %v65
    %134 = vmatprep.subr.mxu0 0.0
    %135 = vmatpush2.msra.mxu0 %v64
    %136 = vmatprep.subr.mxu0 0.0
    %137 = vmatpush2.msra.mxu0 %v63
    %138 = vmatprep.subr.mxu0 0.0
    %139 = vmatpush2.msra.mxu0 %v62
    %140 = vmatprep.subr.mxu0 0.0
    %141 = vmatpush2.msra.mxu0 %v61
    %142 = vmatprep.subr.mxu0 0.0
    %143 = vmatpush2.msra.mxu0 %v60
    %144 = vmatprep.subr.mxu0 0.0
    %145 = vmatpush2.msra.mxu0 %v59
    %146 = vmatprep.mubr.f32.mxu0 %v42
    %147 = vmatmul.mubr.f32.gmra.mxu0 %v41
    %v148 = vpop.f32.mrf.mxu0
    %v149 = vadd.f32 %v80, %v148
    %v150 = vpop.f32.mrf.mxu0
    %151 = vdwg.mxu0
    %152 = vst [vmem:[#allocation7] sm:$0xff] %v149
    // Predicated region
    $region22: #{tpu_custom_call.1} parent=1 // pred_check
      _
    $region23: #{tpu_custom_call.1} parent=1 // pred_check_branch
      %154 = sbr.rel (0) target = $region25
    $region24: #{tpu_custom_call.1} parent=1 // pred_region
      %s156 = ssub.s32 128, 128
      %157 = vsyncadd [#allocation4], %s156
      %s159 = sshll.u32 [#allocation7], 4
      %s160 = int_to_ptr.vmem [resolvable:$true] %s159
      %162 = dma.vmem_to_hbm [thread:$0]  %s160, 128, %s3, [#allocation4]
    $region25: #{tpu_custom_call.1} parent=1 // pred_fallthru
      _
    // Predicated region
    $region26: #{tpu_custom_call.1} parent=1 // pred_check
      _
    $region27: #{tpu_custom_call.1} parent=1 // pred_check_branch
      %164 = sbr.rel (0) target = $region29
    $region28: #{tpu_custom_call.1} parent=1 // pred_region
      %165 = dma.done [#allocation4], 128
    $region29: #{tpu_custom_call.1} parent=1 // pred_fallthru
      _
    %166 = vsyncpa [#allocation3], 1
    %167 = vsyncpa [#allocation6], 1
    %168 = vsyncpa [#allocation4], 1

</llo_original>
